<compile_context>
chip_gen: v6e
topology: v6e:2x2x1
jax: 0.10.0
libtpu: 0.0.40
codegen_flags: <defaults>
</compile_context>

<pallas_src>
import jax
import jax.numpy as jnp
from jax import lax
from jax.experimental import pallas as pl
from jax.experimental.pallas import tpu as pltpu

EPS = 1e-5
_F32 = jnp.float32
_BF16 = jnp.bfloat16
_VMEM_LIMIT = 32 * 1024 * 1024


# ------------------------------ in-kernel helpers ----------------------------
def _conv3x3_dense(pad_ref, x_dense, w_ref, H):
    """3x3 'same' conv of one lane-dense (H, W*Cin) image -> (H, W*Cout).

    Width taps are pre-folded into the banded weight w_ref (3*W*Cin, W*Cout);
    only the height taps move data: three row-shifted, full-lane slices of an
    H-padded buffer, lane-concatenated, then ONE MXU matmul (bf16 operands,
    f32 accumulation).  No patch matrix, no relayout reshapes, no masked
    stores anywhere in this path.
    """
    wc_in = x_dense.shape[-1]
    zrow = jnp.zeros((1, wc_in), pad_ref.dtype)
    pad_ref[0:1, :] = zrow                       # top zero row
    pad_ref[H + 1:H + 2, :] = zrow               # bottom zero row
    pad_ref[1:H + 1, :] = x_dense.astype(pad_ref.dtype)
    patches = jnp.concatenate(
        [pad_ref[kh:kh + H, :].astype(_BF16) for kh in range(3)], axis=-1)
    return jnp.dot(patches, w_ref[...], preferred_element_type=_F32)


def _write_stats(st_ref, y):
    """Partial BN stats for this image, lane-dense: [row-sum, row-sum-of-sq]."""
    st_ref[0, 0:1, :] = jnp.sum(y, axis=0, keepdims=True)
    st_ref[0, 1:2, :] = jnp.sum(y * y, axis=0, keepdims=True)


# ---------------------------------- kernels -----------------------------------
def _make_kernel1(H, use_proj):
    if use_proj:
        def kernel(x_ref, w1_ref, ws_ref,
                   c1_ref, sc_ref, st1_ref, stsc_ref, pad_ref):
            x_dense = x_ref[0]                                  # (H, W*Cin) f32
            conv1 = _conv3x3_dense(pad_ref, x_dense, w1_ref, H)  # (H, W*Cout) f32
            c1_ref[0] = conv1
            _write_stats(st1_ref, conv1)
            # 1x1 projection shortcut (its bias is cancelled by its BN).
            sc = jnp.dot(x_dense.astype(_BF16), ws_ref[...],
                         preferred_element_type=_F32)            # (H, W*Cout) f32
            _write_stats(stsc_ref, sc)           # stats from f32, THEN cast
            sc_ref[0] = sc.astype(sc_ref.dtype)  # bf16 to HBM
    else:
        def kernel(x_ref, w1_ref, c1_ref, st1_ref, pad_ref):
            x_dense = x_ref[0]
            conv1 = _conv3x3_dense(pad_ref, x_dense, w1_ref, H)
            c1_ref[0] = conv1
            _write_stats(st1_ref, conv1)
    return kernel


def _make_kernel2(H):
    def kernel(c1_ref, s1_ref, t1_ref, w2_ref, c2_ref, st2_ref, pad_ref):
        # Folded BN1 affine + ReLU, lane-dense elementwise.
        y1 = jnp.maximum(c1_ref[0] * s1_ref[...] + t1_ref[...], 0.0)  # (H, WC)
        conv2 = _conv3x3_dense(pad_ref, y1, w2_ref, H)
        _write_stats(st2_ref, conv2)             # stats from f32, THEN cast
        c2_ref[0] = conv2.astype(c2_ref.dtype)   # bf16 to HBM
    return kernel


def _kernel3_proj(c2_ref, sc_ref, s2_ref, t2_ref, ss_ref, ts_ref, o_ref):
    sc = sc_ref[...].astype(_F32) * ss_ref[...] + ts_ref[...]
    o_ref[...] = jnp.maximum(
        c2_ref[...].astype(_F32) * s2_ref[...] + t2_ref[...] + sc, 0.0)


def _kernel3_identity(c2_ref, sc_ref, s2_ref, t2_ref, o_ref):
    o_ref[...] = jnp.maximum(
        c2_ref[...].astype(_F32) * s2_ref[...] + t2_ref[...]
        + sc_ref[...].astype(_F32), 0.0)


# ------------------------------ wrapper helpers -------------------------------
def _band3x3(w_oihw, W):
    """Fold the 3 width-taps of a 3x3 OIHW kernel into a banded block matrix.

    band[(kh*W + w)*Cin + ci, wp*Cout + co] = w[co, ci, kh, w - wp + 1]
    (zero outside the band), so that for the H-only-padded, lane-dense image
    the 'same' 3x3 conv is exactly: concat(3 shifted rows) @ band.
    """
    Cout, Cin = w_oihw.shape[0], w_oihw.shape[1]
    wt = jnp.transpose(w_oihw, (2, 3, 1, 0))                     # (kh, kw, ci, co)
    kw = jnp.arange(W)[:, None] - jnp.arange(W)[None, :] + 1     # (w, wp)
    valid = ((kw >= 0) & (kw < 3)).astype(wt.dtype)
    band = wt[:, jnp.clip(kw, 0, 2), :, :]                       # (kh, w, wp, ci, co)
    band = band * valid[None, :, :, None, None]
    band = jnp.transpose(band, (0, 1, 3, 2, 4))                  # (kh, w, ci, wp, co)
    return band.reshape(3 * W * Cin, W * Cout)


def _band1x1(w_oihw, W):
    """1x1 conv as a lane-dense matmul: kron(I_W, w^T) -> (W*Cin, W*Cout)."""
    Cout, Cin = w_oihw.shape[0], w_oihw.shape[1]
    wm = w_oihw.reshape(Cout, Cin).T
    return jnp.kron(jnp.eye(W, dtype=wm.dtype), wm)


def _tile_lane(v, W):
    """Per-channel (C,) vector -> lane-dense (1, W*C) row (built once, hoisted)."""
    C = v.shape[-1]
    return jnp.tile(v.reshape(1, 1, C), (1, W, 1)).reshape(1, W * C)


def _fold_bn(stats, gamma, beta, W, M):
    """Global training-mode BN folded into a per-channel affine (lane-tiled)."""
    C = gamma.shape[-1]
    tot = jnp.sum(stats.astype(_F32), axis=0).reshape(2, W, C).sum(axis=1)
    mean = tot[0] / M
    var = jnp.maximum(tot[1] / M - mean * mean, 0.0)   # clamp (review concern)
    scale = gamma.astype(_F32) * lax.rsqrt(var + EPS)
    shift = beta.astype(_F32) - mean * scale
    return _tile_lane(scale, W), _tile_lane(shift, W)


# ---------------------------------- forward -----------------------------------
def residual_block_forward(x_nchw, params, stride=1):
    # TODO(synk): stride != 1 (strided conv1 / strided 1x1 shortcut) is not
    # implemented inside the kernels; the module default stride=1 is covered.
    assert stride == 1
    N, Cin, H, W = x_nchw.shape
    Cout = params["w1"].shape[0]
    use_proj = (Cin != Cout) or (stride != 1)
    M = N * H * W
    WCi, WCo = W * Cin, W * Cout

    # Module boundary is PyTorch NCHW; convert once to the lane-dense
    # (N, H, W*C) layout used by all kernels.
    # TODO(synk): in a full network keep activations in this layout end-to-end
    # and drop both boundary transposes (pure layout plumbing).
    x = jnp.transpose(x_nchw, (0, 2, 3, 1)).reshape(N, H, WCi).astype(_F32)

    # Banded conv weights (width taps folded in), bf16 MXU operands.  Conv
    # biases are cancelled exactly by training-mode BN -> never loaded.
    w1b = _band3x3(params["w1"].astype(_F32), W).astype(_BF16)   # (3*W*Cin, W*Cout)
    w2b = _band3x3(params["w2"].astype(_F32), W).astype(_BF16)   # (3*W*Cout, W*Cout)

    cparams = pltpu.CompilerParams(
        dimension_semantics=("parallel",), vmem_limit_bytes=_VMEM_LIMIT)

    def full_spec(a):
        return pl.BlockSpec(a.shape, lambda n, nd=a.ndim: (0,) * nd)

    x_spec = pl.BlockSpec((1, H, WCi), lambda n: (n, 0, 0))
    act_spec = pl.BlockSpec((1, H, WCo), lambda n: (n, 0, 0))
    st_spec = pl.BlockSpec((1, 2, WCo), lambda n: (n, 0, 0))
    act_f32 = jax.ShapeDtypeStruct((N, H, WCo), _F32)
    act_bf16 = jax.ShapeDtypeStruct((N, H, WCo), _BF16)
    st_shape = jax.ShapeDtypeStruct((N, 2, WCo), _F32)

    # ---- pass 1: conv1 (+ 1x1 projection shortcut) + partial BN stats -------
    if use_proj:
        wsb = _band1x1(params["ws"].astype(_F32), W).astype(_BF16)
        conv1, sc_raw, st1, stsc = pl.pallas_call(
            _make_kernel1(H, True), grid=(N,),
            in_specs=[x_spec, full_spec(w1b), full_spec(wsb)],
            out_specs=[act_spec, act_spec, st_spec, st_spec],
            out_shape=[act_f32, act_bf16, st_shape, st_shape],
            scratch_shapes=[pltpu.VMEM((H + 2, WCi), _F32)],
            compiler_params=cparams,
        )(x, w1b, wsb)
    else:
        conv1, st1 = pl.pallas_call(
            _make_kernel1(H, False), grid=(N,),
            in_specs=[x_spec, full_spec(w1b)],
            out_specs=[act_spec, st_spec],
            out_shape=[act_f32, st_shape],
            scratch_shapes=[pltpu.VMEM((H + 2, WCi), _F32)],
            compiler_params=cparams,
        )(x, w1b)
        stsc = None
        sc_raw = x          # identity shortcut (Cin == Cout): already (N,H,WCo)

    s1, t1 = _fold_bn(st1, params["g1"], params["be1"], W, M)

    # ---- pass 2: folded BN1 + ReLU -> conv2 + partial BN2 stats -------------
    vec_spec_n = pl.BlockSpec((1, WCo), lambda n: (0, 0))
    conv2, st2 = pl.pallas_call(
        _make_kernel2(H), grid=(N,),
        in_specs=[act_spec, vec_spec_n, vec_spec_n, full_spec(w2b)],
        out_specs=[act_spec, st_spec],
        out_shape=[act_bf16, st_shape],
        scratch_shapes=[pltpu.VMEM((H + 2, WCo), _F32)],
        compiler_params=cparams,
    )(conv1, s1, t1, w2b)

    s2, t2 = _fold_bn(st2, params["g2"], params["be2"], W, M)

    # ---- pass 3: BN2 + shortcut(+BN) + add + ReLU (HBM-bound epilogue) ------
    R = N * H
    conv2f = conv2.reshape(R, WCo)     # merges leading dims only -> free
    scf = sc_raw.reshape(R, WCo)
    # Largest row tile that is a multiple of 8 and divides R (review: pass-3).
    TR = R
    if R % 8 == 0:
        TR = 8
        for cand in (512, 256, 128, 64, 32, 16, 8):
            if R % cand == 0:
                TR = cand
                break
    row_spec = pl.BlockSpec((TR, WCo), lambda r: (r, 0))
    vec_spec_r = pl.BlockSpec((1, WCo), lambda r: (0, 0))

    if use_proj:
        ssc, tsc = _fold_bn(stsc, params["gs"], params["bes"], W, M)
        out_flat = pl.pallas_call(
            _kernel3_proj, grid=(R // TR,),
            in_specs=[row_spec, row_spec, vec_spec_r, vec_spec_r,
                      vec_spec_r, vec_spec_r],
            out_specs=row_spec,
            out_shape=jax.ShapeDtypeStruct((R, WCo), _F32),
            compiler_params=cparams,
        )(conv2f, scf, s2, t2, ssc, tsc)
    else:
        out_flat = pl.pallas_call(
            _kernel3_identity, grid=(R // TR,),
            in_specs=[row_spec, row_spec, vec_spec_r, vec_spec_r],
            out_specs=row_spec,
            out_shape=jax.ShapeDtypeStruct((R, WCo), _F32),
            compiler_params=cparams,
        )(conv2f, scf, s2, t2)

    out = out_flat.reshape(N, H, W, Cout)
    return jnp.transpose(out, (0, 3, 1, 2))                      # back to NCHW


# ------------------------- pure-JAX reference (NCHW, f32) ---------------------
def reference_forward(x_nchw, params, stride=1):
    def conv(x, w, b, s):
        p = w.shape[2] // 2
        y = lax.conv_general_dilated(
            x, w, window_strides=(s, s), padding=((p, p), (p, p)),
            dimension_numbers=("NCHW", "OIHW", "NCHW"))
        return y + b.reshape(1, -1, 1, 1)

    def bn(x, g, b):
        mean = jnp.mean(x, axis=(0, 2, 3), keepdims=True)
        var = jnp.mean((x - mean) ** 2, axis=(0, 2, 3), keepdims=True)
        return (x - mean) / jnp.sqrt(var + EPS) * g.reshape(1, -1, 1, 1) \
            + b.reshape(1, -1, 1, 1)

    Cin, Cout = x_nchw.shape[1], params["w1"].shape[0]
    out = conv(x_nchw, params["w1"], params["b1"], stride)
    out = jnp.maximum(bn(out, params["g1"], params["be1"]), 0.0)
    out = conv(out, params["w2"], params["b2"], 1)
    out = bn(out, params["g2"], params["be2"])
    if stride != 1 or Cin != Cout:
        sc = conv(x_nchw, params["ws"], params["bs"], stride)
        sc = bn(sc, params["gs"], params["bes"])
    else:
        sc = x_nchw
    return jnp.maximum(out + sc, 0.0)


if __name__ == "__main__":
    def make_params(key, Cin, Cout):
        ks = jax.random.split(key, 12)
        p = {
            "w1": 0.1 * jax.random.normal(ks[0], (Cout, Cin, 3, 3), jnp.float32),
            "b1": 0.1 * jax.random.normal(ks[1], (Cout,), jnp.float32),
            "g1": 1.0 + 0.1 * jax.random.normal(ks[2], (Cout,), jnp.float32),
            "be1": 0.1 * jax.random.normal(ks[3], (Cout,), jnp.float32),
            "w2": 0.1 * jax.random.normal(ks[4], (Cout, Cout, 3, 3), jnp.float32),
            "b2": 0.1 * jax.random.normal(ks[5], (Cout,), jnp.float32),
            "g2": 1.0 + 0.1 * jax.random.normal(ks[6], (Cout,), jnp.float32),
            "be2": 0.1 * jax.random.normal(ks[7], (Cout,), jnp.float32),
        }
        if Cin != Cout:
            p["ws"] = 0.1 * jax.random.normal(ks[8], (Cout, Cin, 1, 1), jnp.float32)
            p["bs"] = 0.1 * jax.random.normal(ks[9], (Cout,), jnp.float32)
            p["gs"] = 1.0 + 0.1 * jax.random.normal(ks[10], (Cout,), jnp.float32)
            p["bes"] = 0.1 * jax.random.normal(ks[11], (Cout,), jnp.float32)
        return p

    key = jax.random.PRNGKey(0)
    ok = True
    for (N, Cin, Cout, H, W) in [(2, 4, 8, 16, 16),    # projection shortcut
                                 (2, 8, 8, 16, 16)]:   # identity shortcut
        key, kp, kx = jax.random.split(key, 3)
        params = make_params(kp, Cin, Cout)
        x = jax.random.normal(kx, (N, Cin, H, W), jnp.float32)

        out = jax.block_until_ready(residual_block_forward(x, params, stride=1))
        ref = jax.block_until_ready(reference_forward(x, params, stride=1))

        assert out.shape == (N, Cout, H, W), out.shape
        # bf16 MXU operands / bf16 HBM intermediates vs a pure-f32 reference.
        err = float(jnp.max(jnp.abs(out - ref) / (1.0 + jnp.abs(ref))))
        if not (err < 3e-2):
            ok = False
            print(f"MISMATCH Cin={Cin} Cout={Cout} err={err}")

    if ok:
        print("KERNEL_OK")
</pallas_src>

<mosaic_0001>
module attributes {stable_mosaic.version = 11 : i64} {
  func.func @kernel(%arg0: i32, %arg1: memref<1x16x64xf32, #tpu.memory_space<vmem>>, %arg2: memref<192x128xbf16, #tpu.memory_space<vmem>>, %arg3: memref<64x128xbf16, #tpu.memory_space<vmem>>, %arg4: memref<1x16x128xf32, #tpu.memory_space<vmem>>, %arg5: memref<1x16x128xbf16, #tpu.memory_space<vmem>>, %arg6: memref<1x2x128xf32, #tpu.memory_space<vmem>>, %arg7: memref<1x2x128xf32, #tpu.memory_space<vmem>>, %arg8: memref<18x64xf32, #tpu.memory_space<vmem>>) attributes {dimension_semantics = [#tpu.dimension_semantics<parallel>], iteration_bounds = array<i64: 2>, scalar_prefetch = 0 : i64, scratch_operands = 1 : i64, tpu.core_type = #tpu.core_type<tc>, window_params = [{transform_indices = @transform_0, window_bounds = array<i64: 1, 16, 64>}, {pipeline_mode = #tpu.pipeline_mode<synchronous>, transform_indices = @transform_1, window_bounds = array<i64: 192, 128>}, {pipeline_mode = #tpu.pipeline_mode<synchronous>, transform_indices = @transform_2, window_bounds = array<i64: 64, 128>}, {transform_indices = @transform_3, window_bounds = array<i64: 1, 16, 128>}, {transform_indices = @transform_4, window_bounds = array<i64: 1, 16, 128>}, {transform_indices = @transform_5, window_bounds = array<i64: 1, 2, 128>}, {transform_indices = @transform_6, window_bounds = array<i64: 1, 2, 128>}]} {
    %c0 = arith.constant 0 : index
    %c0_0 = arith.constant 0 : index
    %c0_1 = arith.constant 0 : index
    %0 = vector.load %arg1[%c0, %c0_0, %c0_1] : memref<1x16x64xf32, #tpu.memory_space<vmem>>, vector<1x16x64xf32>
    %1 = vector.shape_cast %0 : vector<1x16x64xf32> to vector<16x64xf32>
    %cst = arith.constant 0.000000e+00 : f32
    %2 = vector.broadcast %cst : f32 to vector<1x64xf32>
    %c0_2 = arith.constant 0 : index
    %c0_3 = arith.constant 0 : index
    %3 = vector.load %arg8[%c0_2, %c0_3] : memref<18x64xf32, #tpu.memory_space<vmem>>, vector<1x64xf32>
    tpu.vector_store %arg8[%c0_2, %c0_3], %2 {strides = array<i32>} : memref<18x64xf32, #tpu.memory_space<vmem>>, vector<1x64xf32>,
    %c17 = arith.constant 17 : index
    %c0_4 = arith.constant 0 : index
    %4 = vector.load %arg8[%c17, %c0_4] : memref<18x64xf32, #tpu.memory_space<vmem>>, vector<1x64xf32>
    tpu.vector_store %arg8[%c17, %c0_4], %2 {strides = array<i32>} : memref<18x64xf32, #tpu.memory_space<vmem>>, vector<1x64xf32>,
    %c1 = arith.constant 1 : index
    %c0_5 = arith.constant 0 : index
    %5 = vector.load %arg8[%c1, %c0_5] : memref<18x64xf32, #tpu.memory_space<vmem>>, vector<16x64xf32>
    tpu.vector_store %arg8[%c1, %c0_5], %1 {strides = array<i32>} : memref<18x64xf32, #tpu.memory_space<vmem>>, vector<16x64xf32>,
    %c0_6 = arith.constant 0 : index
    %c0_7 = arith.constant 0 : index
    %6 = vector.load %arg8[%c0_6, %c0_7] : memref<18x64xf32, #tpu.memory_space<vmem>>, vector<16x64xf32>
    %7 = arith.truncf %6 : vector<16x64xf32> to vector<16x64xbf16>
    %c1_8 = arith.constant 1 : index
    %c0_9 = arith.constant 0 : index
    %8 = vector.load %arg8[%c1_8, %c0_9] : memref<18x64xf32, #tpu.memory_space<vmem>>, vector<16x64xf32>
    %9 = arith.truncf %8 : vector<16x64xf32> to vector<16x64xbf16>
    %c2 = arith.constant 2 : index
    %c0_10 = arith.constant 0 : index
    %10 = vector.load %arg8[%c2, %c0_10] : memref<18x64xf32, #tpu.memory_space<vmem>>, vector<16x64xf32>
    %11 = arith.truncf %10 : vector<16x64xf32> to vector<16x64xbf16>
    %12 = tpu.concatenate %7, %9, %11 in 1 : vector<16x64xbf16>, vector<16x64xbf16>, vector<16x64xbf16> -> vector<16x192xbf16>
    %c0_11 = arith.constant 0 : index
    %c0_12 = arith.constant 0 : index
    %13 = vector.load %arg2[%c0_11, %c0_12] : memref<192x128xbf16, #tpu.memory_space<vmem>>, vector<192x128xbf16>
    %cst_13 = arith.constant dense<0.000000e+00> : vector<16x128xf32>
    %14 = tpu.matmul %12, %13, %cst_13 {dimension_numbers = #tpu.dot_dimension_numbers<[1], [0], [0], [1], [0, 0, 1, 1], [], []>} : vector<16x192xbf16>, vector<192x128xbf16>, vector<16x128xf32> -> vector<16x128xf32>
    %c0_14 = arith.constant 0 : index
    %c0_15 = arith.constant 0 : index
    %c0_16 = arith.constant 0 : index
    %15 = vector.load %arg4[%c0_14, %c0_15, %c0_16] : memref<1x16x128xf32, #tpu.memory_space<vmem>>, vector<1x16x128xf32>
    %16 = vector.shape_cast %15 : vector<1x16x128xf32> to vector<16x128xf32>
    %17 = vector.shape_cast %14 : vector<16x128xf32> to vector<1x16x128xf32>
    tpu.vector_store %arg4[%c0_14, %c0_15, %c0_16], %17 {strides = array<i32>} : memref<1x16x128xf32, #tpu.memory_space<vmem>>, vector<1x16x128xf32>,
    %cst_17 = arith.constant dense<0.000000e+00> : vector<128xf32>
    %18 = vector.multi_reduction <add>, %14, %cst_17 [0] : vector<16x128xf32> to vector<128xf32>
    %19 = vector.shape_cast %18 : vector<128xf32> to vector<1x128xf32>
    %c0_18 = arith.constant 0 : index
    %c0_19 = arith.constant 0 : index
    %c0_20 = arith.constant 0 : index
    %20 = vector.load %arg6[%c0_18, %c0_19, %c0_20] : memref<1x2x128xf32, #tpu.memory_space<vmem>>, vector<1x1x128xf32>
    %21 = vector.shape_cast %20 : vector<1x1x128xf32> to vector<1x128xf32>
    %22 = vector.shape_cast %19 : vector<1x128xf32> to vector<1x1x128xf32>
    tpu.vector_store %arg6[%c0_18, %c0_19, %c0_20], %22 {strides = array<i32>} : memref<1x2x128xf32, #tpu.memory_space<vmem>>, vector<1x1x128xf32>,
    %23 = arith.mulf %14, %14 : vector<16x128xf32>
    %cst_21 = arith.constant dense<0.000000e+00> : vector<128xf32>
    %24 = vector.multi_reduction <add>, %23, %cst_21 [0] : vector<16x128xf32> to vector<128xf32>
    %25 = vector.shape_cast %24 : vector<128xf32> to vector<1x128xf32>
    %c0_22 = arith.constant 0 : index
    %c1_23 = arith.constant 1 : index
    %c0_24 = arith.constant 0 : index
    %26 = vector.load %arg6[%c0_22, %c1_23, %c0_24] : memref<1x2x128xf32, #tpu.memory_space<vmem>>, vector<1x1x128xf32>
    %27 = vector.shape_cast %26 : vector<1x1x128xf32> to vector<1x128xf32>
    %28 = vector.shape_cast %25 : vector<1x128xf32> to vector<1x1x128xf32>
    tpu.vector_store %arg6[%c0_22, %c1_23, %c0_24], %28 {strides = array<i32>} : memref<1x2x128xf32, #tpu.memory_space<vmem>>, vector<1x1x128xf32>,
    %29 = arith.truncf %1 : vector<16x64xf32> to vector<16x64xbf16>
    %c0_25 = arith.constant 0 : index
    %c0_26 = arith.constant 0 : index
    %30 = vector.load %arg3[%c0_25, %c0_26] : memref<64x128xbf16, #tpu.memory_space<vmem>>, vector<64x128xbf16>
    %cst_27 = arith.constant dense<0.000000e+00> : vector<16x128xf32>
    %31 = tpu.matmul %29, %30, %cst_27 {dimension_numbers = #tpu.dot_dimension_numbers<[1], [0], [0], [1], [0, 0, 1, 1], [], []>} : vector<16x64xbf16>, vector<64x128xbf16>, vector<16x128xf32> -> vector<16x128xf32>
    %cst_28 = arith.constant dense<0.000000e+00> : vector<128xf32>
    %32 = vector.multi_reduction <add>, %31, %cst_28 [0] : vector<16x128xf32> to vector<128xf32>
    %33 = vector.shape_cast %32 : vector<128xf32> to vector<1x128xf32>
    %c0_29 = arith.constant 0 : index
    %c0_30 = arith.constant 0 : index
    %c0_31 = arith.constant 0 : index
    %34 = vector.load %arg7[%c0_29, %c0_30, %c0_31] : memref<1x2x128xf32, #tpu.memory_space<vmem>>, vector<1x1x128xf32>
    %35 = vector.shape_cast %34 : vector<1x1x128xf32> to vector<1x128xf32>
    %36 = vector.shape_cast %33 : vector<1x128xf32> to vector<1x1x128xf32>
    tpu.vector_store %arg7[%c0_29, %c0_30, %c0_31], %36 {strides = array<i32>} : memref<1x2x128xf32, #tpu.memory_space<vmem>>, vector<1x1x128xf32>,
    %37 = arith.mulf %31, %31 : vector<16x128xf32>
    %cst_32 = arith.constant dense<0.000000e+00> : vector<128xf32>
    %38 = vector.multi_reduction <add>, %37, %cst_32 [0] : vector<16x128xf32> to vector<128xf32>
    %39 = vector.shape_cast %38 : vector<128xf32> to vector<1x128xf32>
    %c0_33 = arith.constant 0 : index
    %c1_34 = arith.constant 1 : index
    %c0_35 = arith.constant 0 : index
    %40 = vector.load %arg7[%c0_33, %c1_34, %c0_35] : memref<1x2x128xf32, #tpu.memory_space<vmem>>, vector<1x1x128xf32>
    %41 = vector.shape_cast %40 : vector<1x1x128xf32> to vector<1x128xf32>
    %42 = vector.shape_cast %39 : vector<1x128xf32> to vector<1x1x128xf32>
    tpu.vector_store %arg7[%c0_33, %c1_34, %c0_35], %42 {strides = array<i32>} : memref<1x2x128xf32, #tpu.memory_space<vmem>>, vector<1x1x128xf32>,
    %43 = arith.truncf %31 : vector<16x128xf32> to vector<16x128xbf16>
    %c0_36 = arith.constant 0 : index
    %c0_37 = arith.constant 0 : index
    %c0_38 = arith.constant 0 : index
    %44 = vector.load %arg5[%c0_36, %c0_37, %c0_38] : memref<1x16x128xbf16, #tpu.memory_space<vmem>>, vector<1x16x128xbf16>
    %45 = vector.shape_cast %44 : vector<1x16x128xbf16> to vector<16x128xbf16>
    %46 = vector.shape_cast %43 : vector<16x128xbf16> to vector<1x16x128xbf16>
    tpu.vector_store %arg5[%c0_36, %c0_37, %c0_38], %46 {strides = array<i32>} : memref<1x16x128xbf16, #tpu.memory_space<vmem>>, vector<1x16x128xbf16>,
    return
  }
  func.func @transform_0(%arg0: i32) -> (i32, i32, i32) {
    %c0_i32 = arith.constant 0 : i32
    %c0_i32_0 = arith.constant 0 : i32
    %c0_i32_1 = arith.constant 0 : i32
    return %arg0, %c0_i32, %c0_i32_0 : i32, i32, i32
  }
  func.func @transform_1(%arg0: i32) -> (i32, i32) {
    %c0_i32 = arith.constant 0 : i32
    %c0_i32_0 = arith.constant 0 : i32
    %c0_i32_1 = arith.constant 0 : i32
    return %c0_i32, %c0_i32_0 : i32, i32
  }
  func.func @transform_2(%arg0: i32) -> (i32, i32) {
    %c0_i32 = arith.constant 0 : i32
    %c0_i32_0 = arith.constant 0 : i32
    %c0_i32_1 = arith.constant 0 : i32
    return %c0_i32, %c0_i32_0 : i32, i32
  }
  func.func @transform_3(%arg0: i32) -> (i32, i32, i32) {
    %c0_i32 = arith.constant 0 : i32
    %c0_i32_0 = arith.constant 0 : i32
    %c0_i32_1 = arith.constant 0 : i32
    return %arg0, %c0_i32, %c0_i32_0 : i32, i32, i32
  }
  func.func @transform_4(%arg0: i32) -> (i32, i32, i32) {
    %c0_i32 = arith.constant 0 : i32
    %c0_i32_0 = arith.constant 0 : i32
    %c0_i32_1 = arith.constant 0 : i32
    return %arg0, %c0_i32, %c0_i32_0 : i32, i32, i32
  }
  func.func @transform_5(%arg0: i32) -> (i32, i32, i32) {
    %c0_i32 = arith.constant 0 : i32
    %c0_i32_0 = arith.constant 0 : i32
    %c0_i32_1 = arith.constant 0 : i32
    return %arg0, %c0_i32, %c0_i32_0 : i32, i32, i32
  }
  func.func @transform_6(%arg0: i32) -> (i32, i32, i32) {
    %c0_i32 = arith.constant 0 : i32
    %c0_i32_0 = arith.constant 0 : i32
    %c0_i32_1 = arith.constant 0 : i32
    return %arg0, %c0_i32, %c0_i32_0 : i32, i32, i32
  }
}

</mosaic_0001>

<llo_original>
// kernel: tpu_custom_call.1
$region0: #{tpu_custom_call.1}
  #allocation0 [shape = 'u32[]', space=smem, size = 0x4, offset = 0x4, fixed_abs, tag = 'smem constant byte address 0x4 - core index']
  #allocation1 [shape = 'u32[144,128]{1,0:T(1,128)}', space=vmem, size = 0x12000, scoped, tag = 'internal scratch']
  #allocation2 [shape = 'f32[18,64]{1,0:T(8,128)}', space=vmem, size = 0x3000, scoped, tag = 'scratch operand']
  %s0 = inlined_call_operand.hbm [shape: f32[2,16,64], index: 0, kind: input, shape index: {}]
  %s1 = inlined_call_operand.hbm [shape: bf16[192,128], index: 1, kind: input, shape index: {}]
  %s2 = inlined_call_operand.hbm [shape: bf16[64,128], index: 2, kind: input, shape index: {}]
  %s3 = inlined_call_operand.hbm [shape: f32[2,16,128], index: 3, kind: output, shape index: {0}]
  %s4 = inlined_call_operand.hbm [shape: bf16[2,16,128], index: 4, kind: output, shape index: {1}]
  %s5 = inlined_call_operand.hbm [shape: f32[2,2,128], index: 5, kind: output, shape index: {2}]
  %s6 = inlined_call_operand.hbm [shape: f32[2,2,128], index: 6, kind: output, shape index: {3}]
  %7 = xla_tuple %s3, %s4, %s5, %s6
  %s8 = sld [smem:[#allocation0]]
  $region81: #{tpu_custom_call.1} parent=0
    _
  %s10 = ssub.s32 1, %s8
  %s11 = scalar_select 0, %s10, %s8
  $region1: #{tpu_custom_call.1} parent=0
    #allocation3 [shape = 'u8[16384]{0}', space=vmem, size = 0x4000, scoped, tag = 'input window, operand 0']
    #allocation4 [shape = 's32[2]{0}', space=sflag, size = 0x8, scoped, tag = 'scoped memory for tpu_custom_call.1']
    #allocation5 [shape = 's32[2]{0}', space=sflag, size = 0x8, scoped, tag = 'scoped memory for tpu_custom_call.1']
    #allocation6 [shape = 'u8[49152]{0}', space=vmem, size = 0xc000, scoped, tag = 'input window, operand 1, single buffered']
    #allocation7 [shape = 's32[1]{0}', space=sflag, size = 0x4, scoped, tag = 'scoped memory for tpu_custom_call.1']
    #allocation8 [shape = 'u8[16384]{0}', space=vmem, size = 0x4000, scoped, tag = 'input window, operand 2, single buffered']
    #allocation9 [shape = 'u8[16384]{0}', space=vmem, size = 0x4000, scoped, tag = 'output window, operand 0']
    #allocation10 [shape = 'u8[8192]{0}', space=vmem, size = 0x2000, scoped, tag = 'output window, operand 1']
    #allocation11 [shape = 's32[2]{0}', space=sflag, size = 0x8, scoped, tag = 'scoped memory for tpu_custom_call.1']
    #allocation12 [shape = 'u8[2048]{0}', space=vmem, size = 0x800, scoped, tag = 'output window, operand 2']
    #allocation13 [shape = 'u8[2048]{0}', space=vmem, size = 0x800, scoped, tag = 'output window, operand 3']
    #allocation14 [shape = 's32[2]{0}', space=sflag, size = 0x8, scoped, tag = 'scoped memory for tpu_custom_call.1']
    %12 = vsyncpa [#allocation4], 0
    %s13 = scalar_lea.sflag [#allocation4], 1
    %14 = vsyncpa %s13, 0
    %15 = vsyncpa [#allocation7], 0
    %16 = vsyncpa [#allocation5], 0
    %s17 = scalar_lea.sflag [#allocation5], 1
    %18 = vsyncpa %s17, 0
    %19 = vsyncpa [#allocation11], 0
    %s20 = scalar_lea.sflag [#allocation11], 1
    %21 = vsyncpa %s20, 0
    %22 = vsyncpa [#allocation14], 0
    %s23 = scalar_lea.sflag [#allocation14], 1
    %24 = vsyncpa %s23, 0
    loop: start=0, step=1, limit=4
    $region2: #{tpu_custom_call.1} parent=1 // loop_pre_header
      _
    $region3: #{tpu_custom_call.1} parent=1 // loop_header
      %s26 = sphi 0, %s30
      %p27 = scmp.ge.s32.totalorder %s26, 4
      %s36 = sphi 0, %s38
      %s39 = sphi 0, %s36
      %s40 = sphi 0, %s39
      %s56 = sphi 0, %s40
      %s60 = sphi 0, %s60
      %s62 = sphi 0, %s60
      %s63 = sphi 0, %s62
      %s77 = sphi 0, %s63
      %s81 = sphi 0, %s81
      %s83 = sphi 0, %s81
      %s84 = sphi 0, %s83
      %s98 = sphi 0, %s84
      %s104 = sphi 0, %s106
      %s107 = sphi 0, %s104
      %s108 = sphi 0, %s107
      %s124 = sphi 0, %s108
      %s130 = sphi 0, %s132
      %s133 = sphi 0, %s130
      %s134 = sphi 0, %s133
      %s150 = sphi 0, %s134
      %s156 = sphi 0, %s158
      %s159 = sphi 0, %s156
      %s160 = sphi 0, %s159
      %s176 = sphi 0, %s160
      %s182 = sphi 0, %s184
      %s185 = sphi 0, %s182
      %s186 = sphi 0, %s185
      %s202 = sphi 0, %s186
    $region4: #{tpu_custom_call.1} parent=1 // loop_header_branch
      %29 = sbr.rel (%p27) target = $region8
    $region5: #{tpu_custom_call.1} parent=1 // loop_body
      %s31 = ssub.s32 %s26, 1
      %s32 = ssub.s32 %s26, 2
      %s33 = sadd.s32 %s26, 1
      %s34 = ssub.s32 %s26, %s33
      %p35 = scmp.eq.s32.totalorder %s34, 0
      %s37 = sadd.s32 %s36, 1
      %s38 = scalar_select %p35, %s36, %s37
      %p41 = pneg %p35
      %p42 = scmp.eq.s32.totalorder %s26, 1
      %p43 = por %p41, %p42
      %p44 = scmp.ne.s32.totalorder %s36, %s39
      %p45 = scmp.eq.s32.totalorder %s26, 0
      %p46 = por %p44, %p45
      %p47 = scmp.ne.s32.totalorder %s36, %s39
      %p48 = scmp.eq.s32.totalorder %s31, 1
      %p49 = por %p47, %p48
      %p50 = scmp.ne.s32.totalorder %s39, %s40
      %p51 = scmp.eq.s32.totalorder %s31, 0
      %p52 = por %p50, %p51
      %p53 = scmp.ne.s32.totalorder %s39, %s40
      %p54 = scmp.eq.s32.totalorder %s32, 1
      %p55 = por %p53, %p54
      %p57 = scmp.ne.s32.totalorder %s40, %s56
      %p58 = scmp.eq.s32.totalorder %s32, 0
      %p59 = por %p57, %p58
      %s61 = sadd.s32 %s60, 1
      %p64 = scmp.eq.s32.totalorder %s26, 1
      %p65 = scmp.ne.s32.totalorder %s60, %s62
      %p66 = scmp.eq.s32.totalorder %s26, 0
      %p67 = por %p65, %p66
      %p68 = scmp.ne.s32.totalorder %s60, %s62
      %p69 = scmp.eq.s32.totalorder %s31, 1
      %p70 = por %p68, %p69
      %p71 = scmp.ne.s32.totalorder %s62, %s63
      %p72 = scmp.eq.s32.totalorder %s31, 0
      %p73 = por %p71, %p72
      %p74 = scmp.ne.s32.totalorder %s62, %s63
      %p75 = scmp.eq.s32.totalorder %s32, 1
      %p76 = por %p74, %p75
      %p78 = scmp.ne.s32.totalorder %s63, %s77
      %p79 = scmp.eq.s32.totalorder %s32, 0
      %p80 = por %p78, %p79
      %s82 = sadd.s32 %s81, 1
      %p85 = scmp.eq.s32.totalorder %s26, 1
      %p86 = scmp.ne.s32.totalorder %s81, %s83
      %p87 = scmp.eq.s32.totalorder %s26, 0
      %p88 = por %p86, %p87
      %p89 = scmp.ne.s32.totalorder %s81, %s83
      %p90 = scmp.eq.s32.totalorder %s31, 1
      %p91 = por %p89, %p90
      %p92 = scmp.ne.s32.totalorder %s83, %s84
      %p93 = scmp.eq.s32.totalorder %s31, 0
      %p94 = por %p92, %p93
      %p95 = scmp.ne.s32.totalorder %s83, %s84
      %p96 = scmp.eq.s32.totalorder %s32, 1
      %p97 = por %p95, %p96
      %p99 = scmp.ne.s32.totalorder %s84, %s98
      %p100 = scmp.eq.s32.totalorder %s32, 0
      %p101 = por %p99, %p100
      %s102 = ssub.s32 %s26, %s33
      %p103 = scmp.eq.s32.totalorder %s102, 0
      %s105 = sadd.s32 %s104, 1
      %s106 = scalar_select %p103, %s104, %s105
      %p109 = pneg %p103
      %p110 = scmp.eq.s32.totalorder %s26, 1
      %p111 = por %p109, %p110
      %p112 = scmp.ne.s32.totalorder %s104, %s107
      %p113 = scmp.eq.s32.totalorder %s26, 0
      %p114 = por %p112, %p113
      %p115 = scmp.ne.s32.totalorder %s104, %s107
      %p116 = scmp.eq.s32.totalorder %s31, 1
      %p117 = por %p115, %p116
      %p118 = scmp.ne.s32.totalorder %s107, %s108
      %p119 = scmp.eq.s32.totalorder %s31, 0
      %p120 = por %p118, %p119
      %p121 = scmp.ne.s32.totalorder %s107, %s108
      %p122 = scmp.eq.s32.totalorder %s32, 1
      %p123 = por %p121, %p122
      %p125 = scmp.ne.s32.totalorder %s108, %s124
      %p126 = scmp.eq.s32.totalorder %s32, 0
      %p127 = por %p125, %p126
      %s128 = ssub.s32 %s26, %s33
      %p129 = scmp.eq.s32.totalorder %s128, 0
      %s131 = sadd.s32 %s130, 1
      %s132 = scalar_select %p129, %s130, %s131
      %p135 = pneg %p129
      %p136 = scmp.eq.s32.totalorder %s26, 1
      %p137 = por %p135, %p136
      %p138 = scmp.ne.s32.totalorder %s130, %s133
      %p139 = scmp.eq.s32.totalorder %s26, 0
      %p140 = por %p138, %p139
      %p141 = scmp.ne.s32.totalorder %s130, %s133
      %p142 = scmp.eq.s32.totalorder %s31, 1
      %p143 = por %p141, %p142
      %p144 = scmp.ne.s32.totalorder %s133, %s134
      %p145 = scmp.eq.s32.totalorder %s31, 0
      %p146 = por %p144, %p145
      %p147 = scmp.ne.s32.totalorder %s133, %s134
      %p148 = scmp.eq.s32.totalorder %s32, 1
      %p149 = por %p147, %p148
      %p151 = scmp.ne.s32.totalorder %s134, %s150
      %p152 = scmp.eq.s32.totalorder %s32, 0
      %p153 = por %p151, %p152
      %s154 = ssub.s32 %s26, %s33
      %p155 = scmp.eq.s32.totalorder %s154, 0
      %s157 = sadd.s32 %s156, 1
      %s158 = scalar_select %p155, %s156, %s157
      %p161 = pneg %p155
      %p162 = scmp.eq.s32.totalorder %s26, 1
      %p163 = por %p161, %p162
      %p164 = scmp.ne.s32.totalorder %s156, %s159
      %p165 = scmp.eq.s32.totalorder %s26, 0
      %p166 = por %p164, %p165
      %p167 = scmp.ne.s32.totalorder %s156, %s159
      %p168 = scmp.eq.s32.totalorder %s31, 1
      %p169 = por %p167, %p168
      %p170 = scmp.ne.s32.totalorder %s159, %s160
      %p171 = scmp.eq.s32.totalorder %s31, 0
      %p172 = por %p170, %p171
      %p173 = scmp.ne.s32.totalorder %s159, %s160
      %p174 = scmp.eq.s32.totalorder %s32, 1
      %p175 = por %p173, %p174
      %p177 = scmp.ne.s32.totalorder %s160, %s176
      %p178 = scmp.eq.s32.totalorder %s32, 0
      %p179 = por %p177, %p178
      %s180 = ssub.s32 %s26, %s33
      %p181 = scmp.eq.s32.totalorder %s180, 0
      %s183 = sadd.s32 %s182, 1
      %s184 = scalar_select %p181, %s182, %s183
      %p187 = pneg %p181
      %p188 = scmp.eq.s32.totalorder %s26, 1
      %p189 = por %p187, %p188
      %p190 = scmp.ne.s32.totalorder %s182, %s185
      %p191 = scmp.eq.s32.totalorder %s26, 0
      %p192 = por %p190, %p191
      %p193 = scmp.ne.s32.totalorder %s182, %s185
      %p194 = scmp.eq.s32.totalorder %s31, 1
      %p195 = por %p193, %p194
      %p196 = scmp.ne.s32.totalorder %s185, %s186
      %p197 = scmp.eq.s32.totalorder %s31, 0
      %p198 = por %p196, %p197
      %p199 = scmp.ne.s32.totalorder %s185, %s186
      %p200 = scmp.eq.s32.totalorder %s32, 1
      %p201 = por %p199, %p200
      %p203 = scmp.ne.s32.totalorder %s186, %s202
      %p204 = scmp.eq.s32.totalorder %s32, 0
      %p205 = por %p203, %p204
      %p206 = scmp.le.s32.totalorder 1, %s26
      %p207 = scmp.lt.s32.totalorder %s26, 3
      %p208 = pnand %p206, %p207
      %p209 = pneg %p208
      // Predicated region
      $region9: #{tpu_custom_call.1} parent=5 // pred_check
        _
      $region10: #{tpu_custom_call.1} parent=5 // pred_check_branch
        %211 = sbr.rel (%p208) target = $region12
      $region11: #{tpu_custom_call.1} parent=5 // pred_region
        %s212 = ssub.s32 %s26, 1
        // Predicated region
        $region13: #{tpu_custom_call.1} parent=11 // pred_check
          %p213 = pneg %p73
        $region14: #{tpu_custom_call.1} parent=11 // pred_check_branch
          %215 = sbr.rel (%p213) target = $region16
        $region15: #{tpu_custom_call.1} parent=11 // pred_region
          %s217 = ssub.s32 1536, 1536
          %218 = vsyncadd [#allocation7], %s217
          %s219 = sshll.u32 [#allocation6], 4
          %s220 = int_to_ptr.vmem [resolvable:$true] %s219
          %225 = dma.hbm_to_vmem [thread:$0]  %s1, 1536, %s220, [#allocation7], 64, 64, 4
        $region16: #{tpu_custom_call.1} parent=11 // pred_fallthru
          _
        // Predicated region
        $region17: #{tpu_custom_call.1} parent=11 // pred_check
          %p226 = pneg %p94
        $region18: #{tpu_custom_call.1} parent=11 // pred_check_branch
          %228 = sbr.rel (%p226) target = $region20
        $region19: #{tpu_custom_call.1} parent=11 // pred_region
          %s230 = ssub.s32 512, 512
          %231 = vsyncadd [#allocation7], %s230
          %s232 = sshll.u32 [#allocation8], 4
          %s233 = int_to_ptr.vmem [resolvable:$true] %s232
          %238 = dma.hbm_to_vmem [thread:$0]  %s2, 512, %s233, [#allocation7], 64, 64, 4
        $region20: #{tpu_custom_call.1} parent=11 // pred_fallthru
          _
      $region12: #{tpu_custom_call.1} parent=5 // pred_fallthru
        _
      %p239 = scmp.lt.s32.totalorder %s26, 2
      // Predicated region
      $region21: #{tpu_custom_call.1} parent=5 // pred_check
        %p240 = pneg %p239
      $region22: #{tpu_custom_call.1} parent=5 // pred_check_branch
        %242 = sbr.rel (%p240) target = $region24
      $region23: #{tpu_custom_call.1} parent=5 // pred_region
        // Predicated region
        $region25: #{tpu_custom_call.1} parent=23 // pred_check
          %p243 = pneg %p46
        $region26: #{tpu_custom_call.1} parent=23 // pred_check_branch
          %245 = sbr.rel (%p243) target = $region28
        $region27: #{tpu_custom_call.1} parent=23 // pred_region
          %s246 = sand.u32 %s36, 1
          %s247 = scalar_lea.sflag [#allocation4], %s246
          %s248 = sand.u32 %s36, 1
          %s249 = smul.addr %s248, 16
          %s250 = scalar_lea.vmem [#allocation3], %s249
          %s252 = ssub.s32 256, 256
          %253 = vsyncadd %s247, %s252
          %s254 = smul.addr %s26, 2
          %s255 = smul.addr %s254, 128
          %s256 = scalar_lea.hbm %s0, %s255
          %s257 = sshll.u32 %s250, 4
          %s258 = int_to_ptr.vmem [resolvable:$true] %s257
          %263 = dma.hbm_to_vmem [thread:$0]  %s256, 256, %s258, %s247, 128, 128, 8
        $region28: #{tpu_custom_call.1} parent=23 // pred_fallthru
          _
      $region24: #{tpu_custom_call.1} parent=5 // pred_fallthru
        _
      %p264 = scmp.le.s32.totalorder 1, %s26
      %p265 = scmp.lt.s32.totalorder %s26, 3
      %p266 = pnand %p264, %p265
      %p267 = pneg %p266
      // Predicated region
      $region29: #{tpu_custom_call.1} parent=5 // pred_check
        _
      $region30: #{tpu_custom_call.1} parent=5 // pred_check_branch
        %269 = sbr.rel (%p266) target = $region32
      $region31: #{tpu_custom_call.1} parent=5 // pred_region
        %s270 = ssub.s32 %s26, 1
        %s271 = sand.u32 %s39, 1
        %s272 = scalar_lea.sflag [#allocation4], %s271
        %s273 = sand.u32 %s39, 1
        %s274 = smul.addr %s273, 16
        %s275 = scalar_lea.vmem [#allocation3], %s274
        // Predicated region
        $region33: #{tpu_custom_call.1} parent=31 // pred_check
          %p276 = pneg %p52
        $region34: #{tpu_custom_call.1} parent=31 // pred_check_branch
          %278 = sbr.rel (%p276) target = $region36
        $region35: #{tpu_custom_call.1} parent=31 // pred_region
          %279 = dma.done %s272, 256
        $region36: #{tpu_custom_call.1} parent=31 // pred_fallthru
          _
        // Predicated region
        $region37: #{tpu_custom_call.1} parent=31 // pred_check
          %p280 = pneg %p73
        $region38: #{tpu_custom_call.1} parent=31 // pred_check_branch
          %282 = sbr.rel (%p280) target = $region40
        $region39: #{tpu_custom_call.1} parent=31 // pred_region
          %283 = dma.done [#allocation7], 1536
        $region40: #{tpu_custom_call.1} parent=31 // pred_fallthru
          _
        // Predicated region
        $region41: #{tpu_custom_call.1} parent=31 // pred_check
          %p284 = pneg %p94
        $region42: #{tpu_custom_call.1} parent=31 // pred_check_branch
          %286 = sbr.rel (%p284) target = $region44
        $region43: #{tpu_custom_call.1} parent=31 // pred_region
          %287 = dma.done [#allocation7], 512
        $region44: #{tpu_custom_call.1} parent=31 // pred_fallthru
          _
        %s288 = sand.u32 %s39, 1
        %s289 = scalar_lea.sflag [#allocation4], %s288
        %s290 = sand.u32 %s39, 1
        %s291 = smul.addr %s290, 16
        %s292 = scalar_lea.vmem [#allocation3], %s291
        %p293 = pneg %p52
        %p294 = pneg %p49
        %p295 = pneg %p73
        %p296 = pneg %p70
        %p297 = pneg %p94
        %p298 = pneg %p91
        %p299 = pneg %p120
        %p300 = pneg %p117
        %s301 = sand.u32 %s107, 1
        %s302 = scalar_lea.sflag [#allocation5], %s301
        %s303 = sand.u32 %s107, 1
        %s304 = smul.addr %s303, 16
        %s305 = scalar_lea.vmem [#allocation9], %s304
        %p306 = pneg %p146
        %p307 = pneg %p143
        %s308 = sand.u32 %s31, 1
        %s309 = scalar_lea.sflag [#allocation11], %s308
        %s310 = sand.u32 %s133, 1
        %s311 = smul.addr %s310, 8
        %s312 = scalar_lea.vmem [#allocation10], %s311
        %p313 = pneg %p172
        %p314 = pneg %p169
        %s315 = sand.u32 %s31, 1
        %s316 = scalar_lea.sflag [#allocation11], %s315
        %s317 = sand.u32 %s159, 1
        %s318 = smul.addr %s317, 2
        %s319 = scalar_lea.vmem [#allocation12], %s318
        %p320 = pneg %p198
        %p321 = pneg %p195
        %s322 = sand.u32 %s185, 1
        %s323 = scalar_lea.sflag [#allocation14], %s322
        %s324 = sand.u32 %s185, 1
        %s325 = smul.addr %s324, 2
        %s326 = scalar_lea.vmem [#allocation13], %s325
        %v328 = vld [vmem:[%s275] sm:$0xff]
        %v329 = vld [vmem:[%s275 + $0x8] sm:$0xff]
        %vm330 = vcmask 516096
        %331 = vst.msk [vmem:[#allocation2] sm:$0x1] %vm330, 0.0
        %332 = vst.msk [vmem:[#allocation2 + $0x11] sm:$0x1] %vm330, 0.0
        %vm333 = vcmask 523264
        %334 = vst.msk [vmem:[#allocation2 + $0x1] sm:$0xff] %vm333, %v328
        %335 = vst.msk [vmem:[#allocation2 + $0x9] sm:$0xff] %vm333, %v329
        %v336 = vld [vmem:[#allocation2] sm:$0xff]
        %v337 = vld [vmem:[#allocation2 + $0x8] sm:$0xff]
        %v338 = vpack.c.bf16 %v337, %v336
        %v339 = vld [vmem:[#allocation2 + $0x1] sm:$0xff]
        %v340 = vld [vmem:[#allocation2 + $0x9] sm:$0xff]
        %v341 = vpack.c.bf16 %v340, %v339
        %v342 = vld [vmem:[#allocation2 + $0x2] sm:$0xff]
        %v343 = vld [vmem:[#allocation2 + $0xa] sm:$0xff]
        %v344 = vpack.c.bf16 %v343, %v342
        %346 = vrot.lane.b32.xlu0 %v341, 64
        %v347 = vpop.permute.xlu0 %346
        %v350 = vsel %vm333, %v338, %v347
        %v352 = vld [vmem:[#allocation6] sm:$0xf]
        %v353 = vld [vmem:[#allocation6 + $0x4] sm:$0xf]
        %v354 = vld [vmem:[#allocation6 + $0x8] sm:$0xf]
        %v355 = vld [vmem:[#allocation6 + $0xc] sm:$0xf]
        %v356 = vld [vmem:[#allocation6 + $0x10] sm:$0xf]
        %v357 = vld [vmem:[#allocation6 + $0x14] sm:$0xf]
        %v358 = vld [vmem:[#allocation6 + $0x18] sm:$0xf]
        %v359 = vld [vmem:[#allocation6 + $0x1c] sm:$0xf]
        %v360 = vld [vmem:[#allocation6 + $0x20] sm:$0xf]
        %v361 = vld [vmem:[#allocation6 + $0x24] sm:$0xf]
        %v362 = vld [vmem:[#allocation6 + $0x28] sm:$0xf]
        %v363 = vld [vmem:[#allocation6 + $0x2c] sm:$0xf]
        %v364 = vld [vmem:[#allocation6 + $0x30] sm:$0xf]
        %v365 = vld [vmem:[#allocation6 + $0x34] sm:$0xf]
        %v366 = vld [vmem:[#allocation6 + $0x38] sm:$0xf]
        %v367 = vld [vmem:[#allocation6 + $0x3c] sm:$0xf]
        %v368 = vld [vmem:[#allocation6 + $0x40] sm:$0xf]
        %v369 = vld [vmem:[#allocation6 + $0x44] sm:$0xf]
        %v370 = vld [vmem:[#allocation6 + $0x48] sm:$0xf]
        %v371 = vld [vmem:[#allocation6 + $0x4c] sm:$0xf]
        %v372 = vld [vmem:[#allocation6 + $0x50] sm:$0xf]
        %v373 = vld [vmem:[#allocation6 + $0x54] sm:$0xf]
        %v374 = vld [vmem:[#allocation6 + $0x58] sm:$0xf]
        %v375 = vld [vmem:[#allocation6 + $0x5c] sm:$0xf]
        %v400 = vunpack.c.l.b16 %v352
        %v401 = vunpack.c.l.b16 %v353
        %v402 = vunpack.c.l.b16 %v354
        %v403 = vunpack.c.l.b16 %v355
        %v404 = vunpack.c.l.b16 %v356
        %v405 = vunpack.c.l.b16 %v357
        %v406 = vunpack.c.l.b16 %v358
        %v407 = vunpack.c.l.b16 %v359
        %v408 = vunpack.c.l.b16 %v360
        %v409 = vunpack.c.l.b16 %v361
        %v410 = vunpack.c.l.b16 %v362
        %v411 = vunpack.c.l.b16 %v363
        %v412 = vunpack.c.l.b16 %v364
        %v413 = vunpack.c.l.b16 %v365
        %v414 = vunpack.c.l.b16 %v366
        %v415 = vunpack.c.l.b16 %v367
        %v416 = vunpack.c.l.b16 %v368
        %v417 = vunpack.c.l.b16 %v369
        %v418 = vunpack.c.l.b16 %v370
        %v419 = vunpack.c.l.b16 %v371
        %v420 = vunpack.c.l.b16 %v372
        %v421 = vunpack.c.l.b16 %v373
        %v422 = vunpack.c.l.b16 %v374
        %v423 = vunpack.c.l.b16 %v375
        %v424 = vpack.c.b16 %v401, %v400
        %v425 = vpack.c.b16 %v403, %v402
        %v426 = vpack.c.b16 %v405, %v404
        %v427 = vpack.c.b16 %v407, %v406
        %v428 = vpack.c.b16 %v409, %v408
        %v429 = vpack.c.b16 %v411, %v410
        %v430 = vpack.c.b16 %v413, %v412
        %v431 = vpack.c.b16 %v415, %v414
        %v432 = vpack.c.b16 %v417, %v416
        %v433 = vpack.c.b16 %v419, %v418
        %v434 = vpack.c.b16 %v421, %v420
        %v435 = vpack.c.b16 %v423, %v422
        %v449 = vsel %vm333, %v344, 0
        %451 = vmatprep.subr.bf16.mxu0 0
        %452 = vmatpush1.bf16.msra.mxu0 %v431
        %453 = vmatprep.subr.bf16.mxu0 0
        %454 = vmatpush1.bf16.msra.mxu0 %v430
        %455 = vmatprep.subr.bf16.mxu0 0
        %456 = vmatpush1.bf16.msra.mxu0 %v429
        %457 = vmatprep.subr.bf16.mxu0 0
        %458 = vmatpush1.bf16.msra.mxu0 %v428
        %459 = vmatprep.subr.bf16.mxu0 0
        %460 = vmatpush1.bf16.msra.mxu0 %v427
        %461 = vmatprep.subr.bf16.mxu0 0
        %462 = vmatpush1.bf16.msra.mxu0 %v426
        %463 = vmatprep.subr.bf16.mxu0 0
        %464 = vmatpush1.bf16.msra.mxu0 %v425
        %465 = vmatprep.subr.bf16.mxu0 0
        %466 = vmatpush1.bf16.msra.mxu0 %v424
        %467 = vmatprep.subr.bf16.mxu0 0
        %468 = vmatpush2.bf16.msra.mxu0 0
        %469 = vmatprep.subr.bf16.mxu0 0
        %470 = vmatpush2.bf16.msra.mxu0 0
        %471 = vmatprep.subr.bf16.mxu0 0
        %472 = vmatpush2.bf16.msra.mxu0 0
        %473 = vmatprep.subr.bf16.mxu0 0
        %474 = vmatpush2.bf16.msra.mxu0 0
        %475 = vmatprep.subr.bf16.mxu0 0
        %476 = vmatpush2.bf16.msra.mxu0 %v435
        %477 = vmatprep.subr.bf16.mxu0 0
        %478 = vmatpush2.bf16.msra.mxu0 %v434
        %479 = vmatprep.subr.bf16.mxu0 0
        %480 = vmatpush2.bf16.msra.mxu0 %v433
        %481 = vmatprep.subr.bf16.mxu0 0
        %482 = vmatpush2.bf16.msra.mxu0 %v432
        %483 = vmatprep.mubr.bf16.mxu0 %v449
        %484 = vmatmul.mubr.bf16.gmra.mxu0 %v350
        %v485 = vpop.f32.mrf.mxu0
        %v486 = vadd.f32 0.0, %v485
        %v487 = vpop.f32.mrf.mxu0
        %v488 = vpop.f32.mrf.mxu0
        %v489 = vadd.f32 0.0, %v488
        %v490 = vpop.f32.mrf.mxu0
        %491 = vdwg.mxu0
        %492 = vst [vmem:[%s305] sm:$0xff] %v486
        %493 = vst [vmem:[%s305 + $0x8] sm:$0xff] %v489
        %v494 = vadd.f32 %v486, %v489
        %v495 = vrot.slane %v494, 4
        %v496 = vadd.f32 %v494, %v495
        %v497 = vrot.slane %v496, 2
        %v498 = vadd.f32 %v496, %v497
        %v499 = vrot.slane %v498, 1
        %v500 = vadd.f32 %v498, %v499
        %501 = vst [vmem:[%s319] sm:$0x1] %v500
        %v502 = vmul.f32 %v486, %v486
        %v503 = vmul.f32 %v489, %v489
        %v504 = vadd.f32 %v502, %v503
        %v505 = vrot.slane %v504, 4
        %v506 = vadd.f32 %v504, %v505
        %v507 = vrot.slane %v506, 2
        %v508 = vadd.f32 %v506, %v507
        %v509 = vrot.slane %v508, 1
        %v510 = vadd.f32 %v508, %v509
        %511 = vst [vmem:[%s319 + $0x1] sm:$0x1] %v510
        %v512 = vpack.c.bf16 %v329, %v328
        %v513 = vld [vmem:[#allocation8] sm:$0xf]
        %v514 = vld [vmem:[#allocation8 + $0x4] sm:$0xf]
        %v515 = vld [vmem:[#allocation8 + $0x8] sm:$0xf]
        %v516 = vld [vmem:[#allocation8 + $0xc] sm:$0xf]
        %v517 = vld [vmem:[#allocation8 + $0x10] sm:$0xf]
        %v518 = vld [vmem:[#allocation8 + $0x14] sm:$0xf]
        %v519 = vld [vmem:[#allocation8 + $0x18] sm:$0xf]
        %v520 = vld [vmem:[#allocation8 + $0x1c] sm:$0xf]
        %v529 = vunpack.c.l.b16 %v513
        %v530 = vunpack.c.l.b16 %v514
        %v531 = vunpack.c.l.b16 %v515
        %v532 = vunpack.c.l.b16 %v516
        %v533 = vunpack.c.l.b16 %v517
        %v534 = vunpack.c.l.b16 %v518
        %v535 = vunpack.c.l.b16 %v519
        %v536 = vunpack.c.l.b16 %v520
        %v537 = vpack.c.b16 %v530, %v529
        %v538 = vpack.c.b16 %v532, %v531
        %v539 = vpack.c.b16 %v534, %v533
        %v540 = vpack.c.b16 %v536, %v535
        %v546 = vsel %vm333, %v512, 0
        %548 = vmatprep.subr.bf16.mxu0 0
        %549 = vmatpush1.bf16.msra.mxu0 0
        %550 = vmatprep.subr.bf16.mxu0 0
        %551 = vmatpush1.bf16.msra.mxu0 0
        %552 = vmatprep.subr.bf16.mxu0 0
        %553 = vmatpush1.bf16.msra.mxu0 0
        %554 = vmatprep.subr.bf16.mxu0 0
        %555 = vmatpush1.bf16.msra.mxu0 0
        %556 = vmatprep.subr.bf16.mxu0 0
        %557 = vmatpush1.bf16.msra.mxu0 %v540
        %558 = vmatprep.subr.bf16.mxu0 0
        %559 = vmatpush1.bf16.msra.mxu0 %v539
        %560 = vmatprep.subr.bf16.mxu0 0
        %561 = vmatpush1.bf16.msra.mxu0 %v538
        %562 = vmatprep.subr.bf16.mxu0 0
        %563 = vmatpush1.bf16.msra.mxu0 %v537
        %564 = vmatprep.subr.bf16.mxu0 0
        %565 = vmatpush2.bf16.msra.mxu0 0
        %566 = vmatprep.subr.bf16.mxu0 0
        %567 = vmatpush2.bf16.msra.mxu0 0
        %568 = vmatprep.subr.bf16.mxu0 0
        %569 = vmatpush2.bf16.msra.mxu0 0
        %570 = vmatprep.subr.bf16.mxu0 0
        %571 = vmatpush2.bf16.msra.mxu0 0
        %572 = vmatprep.subr.bf16.mxu0 0
        %573 = vmatpush2.bf16.msra.mxu0 0
        %574 = vmatprep.subr.bf16.mxu0 0
        %575 = vmatpush2.bf16.msra.mxu0 0
        %576 = vmatprep.subr.bf16.mxu0 0
        %577 = vmatpush2.bf16.msra.mxu0 0
        %578 = vmatprep.subr.bf16.mxu0 0
        %579 = vmatpush2.bf16.msra.mxu0 0
        %580 = vmatprep.mubr.bf16.mxu0 0
        %581 = vmatmul.mubr.bf16.gmra.mxu0 %v546
        %v582 = vpop.f32.mrf.mxu0
        %v583 = vadd.f32 0.0, %v582
        %v584 = vpop.f32.mrf.mxu0
        %v585 = vpop.f32.mrf.mxu0
        %v586 = vadd.f32 0.0, %v585
        %v587 = vpop.f32.mrf.mxu0
        %588 = vdwg.mxu0
        %v589 = vadd.f32 %v583, %v586
        %v590 = vrot.slane %v589, 4
        %v591 = vadd.f32 %v589, %v590
        %v592 = vrot.slane %v591, 2
        %v593 = vadd.f32 %v591, %v592
        %v594 = vrot.slane %v593, 1
        %v595 = vadd.f32 %v593, %v594
        %596 = vst [vmem:[%s326] sm:$0x1] %v595
        %v597 = vmul.f32 %v583, %v583
        %v598 = vmul.f32 %v586, %v586
        %v599 = vadd.f32 %v597, %v598
        %v600 = vrot.slane %v599, 4
        %v601 = vadd.f32 %v599, %v600
        %v602 = vrot.slane %v601, 2
        %v603 = vadd.f32 %v601, %v602
        %v604 = vrot.slane %v603, 1
        %v605 = vadd.f32 %v603, %v604
        %606 = vst [vmem:[%s326 + $0x1] sm:$0x1] %v605
        %v607 = vpack.c.bf16 %v586, %v583
        %v609 = vunpack.c.l.b16 %v607
        %v610 = vunpack.c.h.b16 %v607
        %v611 = vpack.c.b16 %v609, %v609
        %v612 = vpack.c.b16 %v610, %v610
        %615 = vst [vmem:[%s312] sm:$0xf] %v611
        %616 = vst [vmem:[%s312 + $0x4] sm:$0xf] %v612
        %s617 = sand.u32 %s107, 1
        %s618 = scalar_lea.sflag [#allocation5], %s617
        %s619 = sand.u32 %s107, 1
        %s620 = smul.addr %s619, 16
        %s621 = scalar_lea.vmem [#allocation9], %s620
        %s622 = sand.u32 %s31, 1
        %s623 = scalar_lea.sflag [#allocation11], %s622
        %s624 = sand.u32 %s133, 1
        %s625 = smul.addr %s624, 8
        %s626 = scalar_lea.vmem [#allocation10], %s625
        %s627 = sand.u32 %s31, 1
        %s628 = scalar_lea.sflag [#allocation11], %s627
        %s629 = sand.u32 %s159, 1
        %s630 = smul.addr %s629, 2
        %s631 = scalar_lea.vmem [#allocation12], %s630
        %s632 = sand.u32 %s185, 1
        %s633 = scalar_lea.sflag [#allocation14], %s632
        %s634 = sand.u32 %s185, 1
        %s635 = smul.addr %s634, 2
        %s636 = scalar_lea.vmem [#allocation13], %s635
        // Predicated region
        $region45: #{tpu_custom_call.1} parent=31 // pred_check
          %p637 = pneg %p117
        $region46: #{tpu_custom_call.1} parent=31 // pred_check_branch
          %639 = sbr.rel (%p637) target = $region48
        $region47: #{tpu_custom_call.1} parent=31 // pred_region
          %s641 = ssub.s32 256, 256
          %642 = vsyncadd %s618, %s641
          %s643 = smul.addr %s31, 2
          %s644 = smul.addr %s643, 128
          %s645 = scalar_lea.hbm %s3, %s644
          %s646 = sshll.u32 %s621, 4
          %s647 = int_to_ptr.vmem [resolvable:$true] %s646
          %652 = dma.vmem_to_hbm [thread:$0]  %s647, 256, %s645, %s618, 128, 128, 8
        $region48: #{tpu_custom_call.1} parent=31 // pred_fallthru
          _
        // Predicated region
        $region49: #{tpu_custom_call.1} parent=31 // pred_check
          %p653 = pneg %p143
        $region50: #{tpu_custom_call.1} parent=31 // pred_check_branch
          %655 = sbr.rel (%p653) target = $region52
        $region51: #{tpu_custom_call.1} parent=31 // pred_region
          %s657 = ssub.s32 128, 128
          %658 = vsyncadd %s623, %s657
          %s659 = smul.addr %s31, 2
          %s660 = smul.addr %s659, 64
          %s661 = scalar_lea.hbm %s4, %s660
          %s662 = sshll.u32 %s626, 4
          %s663 = int_to_ptr.vmem [resolvable:$true] %s662
          %668 = dma.vmem_to_hbm [thread:$0]  %s663, 128, %s661, %s623, 64, 64, 4
        $region52: #{tpu_custom_call.1} parent=31 // pred_fallthru
          _
        // Predicated region
        $region53: #{tpu_custom_call.1} parent=31 // pred_check
          %p669 = pneg %p169
        $region54: #{tpu_custom_call.1} parent=31 // pred_check_branch
          %671 = sbr.rel (%p669) target = $region56
        $region55: #{tpu_custom_call.1} parent=31 // pred_region
          %s673 = ssub.s32 32, 32
          %674 = vsyncadd %s628, %s673
          %s675 = smul.addr %s31, 32
          %s676 = scalar_lea.hbm %s5, %s675
          %s678 = sshll.u32 %s631, 4
          %s679 = int_to_ptr.vmem [resolvable:$true] %s678
          %681 = dma.vmem_to_hbm [thread:$0]  %s679, 32, %s676, %s628
        $region56: #{tpu_custom_call.1} parent=31 // pred_fallthru
          _
        // Predicated region
        $region57: #{tpu_custom_call.1} parent=31 // pred_check
          %p682 = pneg %p195
        $region58: #{tpu_custom_call.1} parent=31 // pred_check_branch
          %684 = sbr.rel (%p682) target = $region60
        $region59: #{tpu_custom_call.1} parent=31 // pred_region
          %s686 = ssub.s32 32, 32
          %687 = vsyncadd %s633, %s686
          %s688 = smul.addr %s31, 32
          %s689 = scalar_lea.hbm %s6, %s688
          %s691 = sshll.u32 %s636, 4
          %s692 = int_to_ptr.vmem [resolvable:$true] %s691
          %694 = dma.vmem_to_hbm [thread:$0]  %s692, 32, %s689, %s633
        $region60: #{tpu_custom_call.1} parent=31 // pred_fallthru
          _
      $region32: #{tpu_custom_call.1} parent=5 // pred_fallthru
        _
      %p695 = scmp.le.s32.totalorder 2, %s26
      // Predicated region
      $region61: #{tpu_custom_call.1} parent=5 // pred_check
        %p696 = pneg %p695
      $region62: #{tpu_custom_call.1} parent=5 // pred_check_branch
        %698 = sbr.rel (%p696) target = $region64
      $region63: #{tpu_custom_call.1} parent=5 // pred_region
        %s699 = ssub.s32 %s26, 2
        // Predicated region
        $region65: #{tpu_custom_call.1} parent=63 // pred_check
          %p700 = pneg %p123
        $region66: #{tpu_custom_call.1} parent=63 // pred_check_branch
          %702 = sbr.rel (%p700) target = $region68
        $region67: #{tpu_custom_call.1} parent=63 // pred_region
          %s703 = sand.u32 %s108, 1
          %s704 = scalar_lea.sflag [#allocation5], %s703
          %s705 = sand.u32 %s108, 1
          %s706 = smul.addr %s705, 16
          %s707 = scalar_lea.vmem [#allocation9], %s706
          %708 = dma.done %s704, 256
        $region68: #{tpu_custom_call.1} parent=63 // pred_fallthru
          _
        // Predicated region
        $region69: #{tpu_custom_call.1} parent=63 // pred_check
          %p709 = pneg %p149
        $region70: #{tpu_custom_call.1} parent=63 // pred_check_branch
          %711 = sbr.rel (%p709) target = $region72
        $region71: #{tpu_custom_call.1} parent=63 // pred_region
          %s712 = sand.u32 %s32, 1
          %s713 = scalar_lea.sflag [#allocation11], %s712
          %s714 = sand.u32 %s134, 1
          %s715 = smul.addr %s714, 8
          %s716 = scalar_lea.vmem [#allocation10], %s715
          %717 = dma.done %s713, 128
        $region72: #{tpu_custom_call.1} parent=63 // pred_fallthru
          _
        // Predicated region
        $region73: #{tpu_custom_call.1} parent=63 // pred_check
          %p718 = pneg %p175
        $region74: #{tpu_custom_call.1} parent=63 // pred_check_branch
          %720 = sbr.rel (%p718) target = $region76
        $region75: #{tpu_custom_call.1} parent=63 // pred_region
          %s721 = sand.u32 %s32, 1
          %s722 = scalar_lea.sflag [#allocation11], %s721
          %s723 = sand.u32 %s160, 1
          %s724 = smul.addr %s723, 2
          %s725 = scalar_lea.vmem [#allocation12], %s724
          %726 = dma.done %s722, 32
        $region76: #{tpu_custom_call.1} parent=63 // pred_fallthru
          _
        // Predicated region
        $region77: #{tpu_custom_call.1} parent=63 // pred_check
          %p727 = pneg %p201
        $region78: #{tpu_custom_call.1} parent=63 // pred_check_branch
          %729 = sbr.rel (%p727) target = $region80
        $region79: #{tpu_custom_call.1} parent=63 // pred_region
          %s730 = sand.u32 %s186, 1
          %s731 = scalar_lea.sflag [#allocation14], %s730
          %s732 = sand.u32 %s186, 1
          %s733 = smul.addr %s732, 2
          %s734 = scalar_lea.vmem [#allocation13], %s733
          %735 = dma.done %s731, 32
        $region80: #{tpu_custom_call.1} parent=63 // pred_fallthru
          _
      $region64: #{tpu_custom_call.1} parent=5 // pred_fallthru
        _
    $region6: #{tpu_custom_call.1} parent=1 // loop_footer
      %s30 = sadd.s32 1, %s26
    $region7: #{tpu_custom_call.1} parent=1 // loop_footer_branch
      %25 = sbr.rel target = $region3
    $region8: #{tpu_custom_call.1} parent=1 // loop_exit
      _
    %736 = vsyncpa [#allocation4], 1
    %s737 = scalar_lea.sflag [#allocation4], 1
    %738 = vsyncpa %s737, 1
    %739 = vsyncpa [#allocation7], 1
    %740 = vsyncpa [#allocation5], 1
    %s741 = scalar_lea.sflag [#allocation5], 1
    %742 = vsyncpa %s741, 1
    %743 = vsyncpa [#allocation11], 1
    %s744 = scalar_lea.sflag [#allocation11], 1
    %745 = vsyncpa %s744, 1
    %746 = vsyncpa [#allocation14], 1
    %s747 = scalar_lea.sflag [#allocation14], 1
    %748 = vsyncpa %s747, 1

</llo_original>
